<compile_context>
chip_gen: v7x
topology: tpu7x:2x2x1
jax: 0.10.0
libtpu: 0.0.40
codegen_flags: <defaults>
</compile_context>

<pallas_src>
import functools

import jax
import jax.numpy as jnp
from jax.experimental import pallas as pl
from jax.experimental.pallas import tpu as pltpu


def mlp_kernel(x_ref, w1_ref, b1_ref, w2_ref, b2_ref, o_ref):
    # hidden = tanh(x @ W1 + b1)   (f32 accumulation on the MXU, tanh on the EUP)
    h = jnp.tanh(
        jnp.dot(x_ref[...], w1_ref[...], preferred_element_type=jnp.float32)
        + b1_ref[...]
    )
    # out = hidden @ W2_padded + b2_padded   (lane-dense 128-wide store)
    o_ref[...] = (
        jnp.dot(h, w2_ref[...], preferred_element_type=jnp.float32) + b2_ref[...]
    ).astype(o_ref.dtype)


def _round_up(x, m):
    return ((x + m - 1) // m) * m


@functools.partial(jax.jit, static_argnames=("tm",))
def neuralnet_forward(x, w1, b1, w2, b2, *, tm=512):
    """Forward pass of NeuralNet: Linear(in,128) -> Tanh -> Linear(128,out).

    x  : (N, in_size)     float32
    w1 : (in_size, 128)   float32   (transposed vs. torch's (128, in_size))
    b1 : (1, 128)         float32
    w2 : (128, out_size)  float32
    b2 : (1, out_size)    float32
    returns (N, out_size) float32
    """
    n, in_size = x.shape
    hidden = w1.shape[1]
    out_size = w2.shape[1]

    # --- lane-dense output: pad the out dimension to a multiple of 128 ---------
    out_pad = _round_up(max(out_size, 128), 128)
    if out_pad != out_size:
        w2 = jnp.pad(w2, ((0, 0), (0, out_pad - out_size)))
        b2 = jnp.pad(b2, ((0, 0), (0, out_pad - out_size)))

    # --- row tiling: multiple of 8 sublanes, capped at `tm` rows ---------------
    tm_eff = min(tm, _round_up(n, 8))
    tm_eff = max(8, _round_up(tm_eff, 8))
    n_pad = _round_up(n, tm_eff)
    if n_pad != n:
        x = jnp.pad(x, ((0, n_pad - n), (0, 0)))

    grid = (n_pad // tm_eff,)

    cost = pl.CostEstimate(
        flops=2 * n_pad * in_size * hidden + 2 * n_pad * hidden * out_pad,
        transcendentals=n_pad * hidden,  # tanh
        bytes_accessed=4
        * (
            n_pad * in_size
            + in_size * hidden
            + hidden
            + hidden * out_pad
            + out_pad
            + n_pad * out_pad
        ),
    )

    y_pad = pl.pallas_call(
        mlp_kernel,
        out_shape=jax.ShapeDtypeStruct((n_pad, out_pad), jnp.float32),
        grid_spec=pltpu.PrefetchScalarGridSpec(
            num_scalar_prefetch=0,
            grid=grid,
            in_specs=[
                # x: one row tile per grid step
                pl.BlockSpec((tm_eff, in_size), lambda i: (i, 0)),
                # weights/biases: full blocks, resident in VMEM across all steps
                pl.BlockSpec((in_size, hidden), lambda i: (0, 0)),
                pl.BlockSpec((1, hidden), lambda i: (0, 0)),
                pl.BlockSpec((hidden, out_pad), lambda i: (0, 0)),
                pl.BlockSpec((1, out_pad), lambda i: (0, 0)),
            ],
            out_specs=pl.BlockSpec((tm_eff, out_pad), lambda i: (i, 0)),
        ),
        compiler_params=pltpu.CompilerParams(
            # row tiles are independent -> shard across TensorCores on v7x
            dimension_semantics=("parallel",),
        ),
        cost_estimate=cost,
    )(x, w1, b1, w2, b2)

    # strip the row / lane padding
    return y_pad[:n, :out_size]


def init_params(key, in_size, hidden, out_size):
    """Deterministic init mimicking torch.nn.Linear (uniform +/- 1/sqrt(fan_in))."""
    k1, k2, k3, k4 = jax.random.split(key, 4)
    bound1 = 1.0 / jnp.sqrt(in_size)
    bound2 = 1.0 / jnp.sqrt(hidden)
    w1 = jax.random.uniform(k1, (in_size, hidden), jnp.float32, -bound1, bound1)
    b1 = jax.random.uniform(k2, (1, hidden), jnp.float32, -bound1, bound1)
    w2 = jax.random.uniform(k3, (hidden, out_size), jnp.float32, -bound2, bound2)
    b2 = jax.random.uniform(k4, (1, out_size), jnp.float32, -bound2, bound2)
    return w1, b1, w2, b2


if __name__ == "__main__":
    IN_SIZE, HIDDEN, OUT_SIZE = 32, 128, 4

    key = jax.random.PRNGKey(0)
    kx, kp, kx2 = jax.random.split(key, 3)
    w1, b1, w2, b2 = init_params(kp, IN_SIZE, HIDDEN, OUT_SIZE)

    # --- small batch (matches the module's expected usage) ---------------------
    N = 8
    x = jax.random.normal(kx, (N, IN_SIZE), dtype=jnp.float32)
    y = neuralnet_forward(x, w1, b1, w2, b2)
    jax.block_until_ready(y)
    y_ref = jnp.tanh(x @ w1 + b1) @ w2 + b2
    assert y.shape == (N, OUT_SIZE)
    assert jnp.allclose(y, y_ref, atol=1e-5), "mismatch vs reference (small batch)"

    # --- larger batch: exercises the row-tiled, multi-step pipelined grid ------
    N2 = 1024
    x2 = jax.random.normal(kx2, (N2, IN_SIZE), dtype=jnp.float32)
    y2 = neuralnet_forward(x2, w1, b1, w2, b2)
    jax.block_until_ready(y2)
    y2_ref = jnp.tanh(x2 @ w1 + b1) @ w2 + b2
    assert y2.shape == (N2, OUT_SIZE)
    assert jnp.allclose(y2, y2_ref, atol=1e-5), "mismatch vs reference (large batch)"

    # TODO(synk): optional bf16 path for x/w1/w2 (f32 accumulation) would roughly
    # double MXU throughput on v6e/v7x at large N; kept f32 here for exactness.
    print("KERNEL_OK")
</pallas_src>

<mosaic_0001>
module attributes {stable_mosaic.version = 11 : i64} {
  func.func @mlp_kernel(%arg0: i32, %arg1: memref<8x32xf32, #tpu.memory_space<vmem>>, %arg2: memref<32x128xf32, #tpu.memory_space<vmem>>, %arg3: memref<1x128xf32, #tpu.memory_space<vmem>>, %arg4: memref<128x128xf32, #tpu.memory_space<vmem>>, %arg5: memref<1x128xf32, #tpu.memory_space<vmem>>, %arg6: memref<8x128xf32, #tpu.memory_space<vmem>>) attributes {dimension_semantics = [#tpu.dimension_semantics<parallel>], iteration_bounds = array<i64: 1>, scalar_prefetch = 0 : i64, scratch_operands = 0 : i64, tpu.core_type = #tpu.core_type<tc>, window_params = [{transform_indices = @transform_0, window_bounds = array<i64: 8, 32>}, {pipeline_mode = #tpu.pipeline_mode<synchronous>, transform_indices = @transform_1, window_bounds = array<i64: 32, 128>}, {pipeline_mode = #tpu.pipeline_mode<synchronous>, transform_indices = @transform_2, window_bounds = array<i64: 1, 128>}, {pipeline_mode = #tpu.pipeline_mode<synchronous>, transform_indices = @transform_3, window_bounds = array<i64: 128, 128>}, {pipeline_mode = #tpu.pipeline_mode<synchronous>, transform_indices = @transform_4, window_bounds = array<i64: 1, 128>}, {transform_indices = @transform_5, window_bounds = array<i64: 8, 128>}]} {
    %c0 = arith.constant 0 : index
    %c0_0 = arith.constant 0 : index
    %0 = vector.load %arg1[%c0, %c0_0] : memref<8x32xf32, #tpu.memory_space<vmem>>, vector<8x32xf32>
    %c0_1 = arith.constant 0 : index
    %c0_2 = arith.constant 0 : index
    %1 = vector.load %arg2[%c0_1, %c0_2] : memref<32x128xf32, #tpu.memory_space<vmem>>, vector<32x128xf32>
    %cst = arith.constant dense<0.000000e+00> : vector<8x128xf32>
    %2 = tpu.matmul %0, %1, %cst {dimension_numbers = #tpu.dot_dimension_numbers<[1], [0], [0], [1], [0, 0, 1, 1], [], []>} : vector<8x32xf32>, vector<32x128xf32>, vector<8x128xf32> -> vector<8x128xf32>
    %c0_3 = arith.constant 0 : index
    %c0_4 = arith.constant 0 : index
    %3 = vector.load %arg3[%c0_3, %c0_4] : memref<1x128xf32, #tpu.memory_space<vmem>>, vector<1x128xf32>
    %4 = vector.broadcast %3 : vector<1x128xf32> to vector<8x128xf32>
    %5 = arith.addf %2, %4 : vector<8x128xf32>
    %6 = math.tanh %5 : vector<8x128xf32>
    %c0_5 = arith.constant 0 : index
    %c0_6 = arith.constant 0 : index
    %7 = vector.load %arg4[%c0_5, %c0_6] : memref<128x128xf32, #tpu.memory_space<vmem>>, vector<128x128xf32>
    %cst_7 = arith.constant dense<0.000000e+00> : vector<8x128xf32>
    %8 = tpu.matmul %6, %7, %cst_7 {dimension_numbers = #tpu.dot_dimension_numbers<[1], [0], [0], [1], [0, 0, 1, 1], [], []>} : vector<8x128xf32>, vector<128x128xf32>, vector<8x128xf32> -> vector<8x128xf32>
    %c0_8 = arith.constant 0 : index
    %c0_9 = arith.constant 0 : index
    %9 = vector.load %arg5[%c0_8, %c0_9] : memref<1x128xf32, #tpu.memory_space<vmem>>, vector<1x128xf32>
    %10 = vector.broadcast %9 : vector<1x128xf32> to vector<8x128xf32>
    %11 = arith.addf %8, %10 : vector<8x128xf32>
    %c0_10 = arith.constant 0 : index
    %c0_11 = arith.constant 0 : index
    %12 = vector.load %arg6[%c0_10, %c0_11] : memref<8x128xf32, #tpu.memory_space<vmem>>, vector<8x128xf32>
    tpu.vector_store %arg6[%c0_10, %c0_11], %11 {strides = array<i32>} : memref<8x128xf32, #tpu.memory_space<vmem>>, vector<8x128xf32>,
    return
  }
  func.func @transform_0(%arg0: i32) -> (i32, i32) {
    %c0_i32 = arith.constant 0 : i32
    %c0_i32_0 = arith.constant 0 : i32
    return %arg0, %c0_i32 : i32, i32
  }
  func.func @transform_1(%arg0: i32) -> (i32, i32) {
    %c0_i32 = arith.constant 0 : i32
    %c0_i32_0 = arith.constant 0 : i32
    %c0_i32_1 = arith.constant 0 : i32
    return %c0_i32, %c0_i32_0 : i32, i32
  }
  func.func @transform_2(%arg0: i32) -> (i32, i32) {
    %c0_i32 = arith.constant 0 : i32
    %c0_i32_0 = arith.constant 0 : i32
    %c0_i32_1 = arith.constant 0 : i32
    return %c0_i32, %c0_i32_0 : i32, i32
  }
  func.func @transform_3(%arg0: i32) -> (i32, i32) {
    %c0_i32 = arith.constant 0 : i32
    %c0_i32_0 = arith.constant 0 : i32
    %c0_i32_1 = arith.constant 0 : i32
    return %c0_i32, %c0_i32_0 : i32, i32
  }
  func.func @transform_4(%arg0: i32) -> (i32, i32) {
    %c0_i32 = arith.constant 0 : i32
    %c0_i32_0 = arith.constant 0 : i32
    %c0_i32_1 = arith.constant 0 : i32
    return %c0_i32, %c0_i32_0 : i32, i32
  }
  func.func @transform_5(%arg0: i32) -> (i32, i32) {
    %c0_i32 = arith.constant 0 : i32
    %c0_i32_0 = arith.constant 0 : i32
    return %arg0, %c0_i32 : i32, i32
  }
}

</mosaic_0001>

<llo_original>
// kernel: neuralnet_forward.1
$region0: #{neuralnet_forward.1}
  #allocation0 [shape = 'u32[]', space=smem, size = 0x4, offset = 0x4, fixed_abs, tag = 'smem constant byte address 0x4 - core index']
  #allocation1 [shape = 'u32[144,128]{1,0:T(1,128)}', space=vmem, size = 0x12000, scoped, tag = 'internal scratch']
  %s0 = inlined_call_operand.vmem [shape: f32[8,32], index: 0, kind: input, shape index: {}]
  %s1 = inlined_call_operand.vmem [shape: f32[32,128], index: 1, kind: input, shape index: {}]
  %s2 = inlined_call_operand.vmem [shape: f32[1,128], index: 2, kind: input, shape index: {}]
  %s3 = inlined_call_operand.vmem [shape: f32[128,128], index: 3, kind: input, shape index: {}]
  %s4 = inlined_call_operand.vmem [shape: f32[1,128], index: 4, kind: input, shape index: {}]
  %s5 = inlined_call_operand.vmem [shape: f32[8,128], index: 5, kind: output, shape index: {}]
  %s6 = sld [smem:[#allocation0]]
  $region30: #{neuralnet_forward.1} parent=0
    _
  %s8 = ssub.s32 1, %s6
  %s9 = scalar_select 0, %s8, %s6
  // Predicated region
  $region2: #{neuralnet_forward.1} parent=0 // pred_check
    _
  $region3: #{neuralnet_forward.1} parent=0 // pred_check_branch
    %11 = sbr.rel (0) target = $region5
  $region4: #{neuralnet_forward.1} parent=0 // pred_region
    _
  $region5: #{neuralnet_forward.1} parent=0 // pred_fallthru
    _
  // Predicated region
  $region6: #{neuralnet_forward.1} parent=0 // pred_check
    _
  $region7: #{neuralnet_forward.1} parent=0 // pred_check_branch
    %13 = sbr.rel (0) target = $region9
  $region8: #{neuralnet_forward.1} parent=0 // pred_region
    _
  $region9: #{neuralnet_forward.1} parent=0 // pred_fallthru
    _
  // Predicated region
  $region10: #{neuralnet_forward.1} parent=0 // pred_check
    _
  $region11: #{neuralnet_forward.1} parent=0 // pred_check_branch
    %15 = sbr.rel (0) target = $region13
  $region12: #{neuralnet_forward.1} parent=0 // pred_region
    _
  $region13: #{neuralnet_forward.1} parent=0 // pred_fallthru
    _
  // Predicated region
  $region14: #{neuralnet_forward.1} parent=0 // pred_check
    _
  $region15: #{neuralnet_forward.1} parent=0 // pred_check_branch
    %17 = sbr.rel (0) target = $region17
  $region16: #{neuralnet_forward.1} parent=0 // pred_region
    _
  $region17: #{neuralnet_forward.1} parent=0 // pred_fallthru
    _
  // Predicated region
  $region18: #{neuralnet_forward.1} parent=0 // pred_check
    _
  $region19: #{neuralnet_forward.1} parent=0 // pred_check_branch
    %19 = sbr.rel (0) target = $region21
  $region20: #{neuralnet_forward.1} parent=0 // pred_region
    _
  $region21: #{neuralnet_forward.1} parent=0 // pred_fallthru
    _
  %v20 = vld [vmem:[%s0] sm:$0xff]
  %v21 = vld [vmem:[%s1] sm:$0xff]
  %v22 = vld [vmem:[%s1 + $0x8] sm:$0xff]
  %v23 = vld [vmem:[%s1 + $0x10] sm:$0xff]
  %v24 = vld [vmem:[%s1 + $0x18] sm:$0xff]
  %v25 = vld [vmem:[%s2] sm:$0x1]
  %v27 = vlaneseq
  %v28 = vshrl.u32 %v27, 7
  %v29 = vsub.s32 0, %v28
  %v30 = vrot.slane %v25, %v29
  %vm32 = vcmask 261120
  %v34 = vsel %vm32, %v20, 0
  %36 = vmatprep.subr.mxu0 0.0
  %37 = vmatpush1.msra.mxu0 %v21
  %38 = vmatprep.subr.mxu0 0.0
  %39 = vmatpush1.msra.mxu0 %v22
  %40 = vmatprep.subr.mxu0 0.0
  %41 = vmatpush1.msra.mxu0 %v23
  %42 = vmatprep.subr.mxu0 0.0
  %43 = vmatpush1.msra.mxu0 %v24
  %44 = vmatprep.subr.mxu0 0.0
  %45 = vmatpush1.msra.mxu0 0.0
  %46 = vmatprep.subr.mxu0 0.0
  %47 = vmatpush1.msra.mxu0 0.0
  %48 = vmatprep.subr.mxu0 0.0
  %49 = vmatpush1.msra.mxu0 0.0
  %50 = vmatprep.subr.mxu0 0.0
  %51 = vmatpush1.msra.mxu0 0.0
  %52 = vmatprep.subr.mxu0 0.0
  %53 = vmatpush1.msra.mxu0 0.0
  %54 = vmatprep.subr.mxu0 0.0
  %55 = vmatpush1.msra.mxu0 0.0
  %56 = vmatprep.subr.mxu0 0.0
  %57 = vmatpush1.msra.mxu0 0.0
  %58 = vmatprep.subr.mxu0 0.0
  %59 = vmatpush1.msra.mxu0 0.0
  %60 = vmatprep.subr.mxu0 0.0
  %61 = vmatpush1.msra.mxu0 0.0
  %62 = vmatprep.subr.mxu0 0.0
  %63 = vmatpush1.msra.mxu0 0.0
  %64 = vmatprep.subr.mxu0 0.0
  %65 = vmatpush1.msra.mxu0 0.0
  %66 = vmatprep.subr.mxu0 0.0
  %67 = vmatpush1.msra.mxu0 0.0
  %68 = vmatprep.subr.mxu0 0.0
  %69 = vmatpush1.msra.mxu0 0.0
  %70 = vmatprep.subr.mxu0 0.0
  %71 = vmatpush1.msra.mxu0 0.0
  %72 = vmatprep.subr.mxu0 0.0
  %73 = vmatpush1.msra.mxu0 0.0
  %74 = vmatprep.subr.mxu0 0.0
  %75 = vmatpush1.msra.mxu0 0.0
  %76 = vmatprep.subr.mxu0 0.0
  %77 = vmatpush1.msra.mxu0 0.0
  %78 = vmatprep.subr.mxu0 0.0
  %79 = vmatpush1.msra.mxu0 0.0
  %80 = vmatprep.subr.mxu0 0.0
  %81 = vmatpush1.msra.mxu0 0.0
  %82 = vmatprep.subr.mxu0 0.0
  %83 = vmatpush1.msra.mxu0 0.0
  %84 = vmatprep.subr.mxu0 0.0
  %85 = vmatpush1.msra.mxu0 0.0
  %86 = vmatprep.subr.mxu0 0.0
  %87 = vmatpush1.msra.mxu0 0.0
  %88 = vmatprep.subr.mxu0 0.0
  %89 = vmatpush1.msra.mxu0 0.0
  %90 = vmatprep.subr.mxu0 0.0
  %91 = vmatpush1.msra.mxu0 0.0
  %92 = vmatprep.subr.mxu0 0.0
  %93 = vmatpush1.msra.mxu0 0.0
  %94 = vmatprep.subr.mxu0 0.0
  %95 = vmatpush1.msra.mxu0 0.0
  %96 = vmatprep.subr.mxu0 0.0
  %97 = vmatpush1.msra.mxu0 0.0
  %98 = vmatprep.subr.mxu0 0.0
  %99 = vmatpush1.msra.mxu0 0.0
  %100 = vmatprep.mubr.f32.mxu0 0.0
  %101 = vmatmul.mubr.f32.gmra.mrb[0].mxu0 %v34
  %v102 = vpop.f32.mrb[0].mxu0
  %v103 = vadd.f32 %v30, %v102
  %v104 = vpop.f32.mrb[0].mxu0
  %105 = vdwg.mxu0
  %v106 = vtanh.pop %v103
  %v107 = vld [vmem:[%s3] sm:$0xff]
  %v108 = vld [vmem:[%s3 + $0x8] sm:$0xff]
  %v109 = vld [vmem:[%s3 + $0x10] sm:$0xff]
  %v110 = vld [vmem:[%s3 + $0x18] sm:$0xff]
  %v111 = vld [vmem:[%s3 + $0x20] sm:$0xff]
  %v112 = vld [vmem:[%s3 + $0x28] sm:$0xff]
  %v113 = vld [vmem:[%s3 + $0x30] sm:$0xff]
  %v114 = vld [vmem:[%s3 + $0x38] sm:$0xff]
  %v115 = vld [vmem:[%s3 + $0x40] sm:$0xff]
  %v116 = vld [vmem:[%s3 + $0x48] sm:$0xff]
  %v117 = vld [vmem:[%s3 + $0x50] sm:$0xff]
  %v118 = vld [vmem:[%s3 + $0x58] sm:$0xff]
  %v119 = vld [vmem:[%s3 + $0x60] sm:$0xff]
  %v120 = vld [vmem:[%s3 + $0x68] sm:$0xff]
  %v121 = vld [vmem:[%s3 + $0x70] sm:$0xff]
  %v122 = vld [vmem:[%s3 + $0x78] sm:$0xff]
  %v123 = vld [vmem:[%s4] sm:$0x1]
  %v125 = vlaneseq
  %v126 = vshrl.u32 %v125, 7
  %v127 = vsub.s32 0, %v126
  %v128 = vrot.slane %v123, %v127
  %130 = vmatprep.subr.mxu0 0.0
  %131 = vmatpush1.msra.mxu0 %v107
  %132 = vmatprep.subr.mxu0 0.0
  %133 = vmatpush1.msra.mxu0 %v108
  %134 = vmatprep.subr.mxu0 0.0
  %135 = vmatpush1.msra.mxu0 %v109
  %136 = vmatprep.subr.mxu0 0.0
  %137 = vmatpush1.msra.mxu0 %v110
  %138 = vmatprep.subr.mxu0 0.0
  %139 = vmatpush1.msra.mxu0 %v111
  %140 = vmatprep.subr.mxu0 0.0
  %141 = vmatpush1.msra.mxu0 %v112
  %142 = vmatprep.subr.mxu0 0.0
  %143 = vmatpush1.msra.mxu0 %v113
  %144 = vmatprep.subr.mxu0 0.0
  %145 = vmatpush1.msra.mxu0 %v114
  %146 = vmatprep.subr.mxu0 0.0
  %147 = vmatpush1.msra.mxu0 %v115
  %148 = vmatprep.subr.mxu0 0.0
  %149 = vmatpush1.msra.mxu0 %v116
  %150 = vmatprep.subr.mxu0 0.0
  %151 = vmatpush1.msra.mxu0 %v117
  %152 = vmatprep.subr.mxu0 0.0
  %153 = vmatpush1.msra.mxu0 %v118
  %154 = vmatprep.subr.mxu0 0.0
  %155 = vmatpush1.msra.mxu0 %v119
  %156 = vmatprep.subr.mxu0 0.0
  %157 = vmatpush1.msra.mxu0 %v120
  %158 = vmatprep.subr.mxu0 0.0
  %159 = vmatpush1.msra.mxu0 %v121
  %160 = vmatprep.subr.mxu0 0.0
  %161 = vmatpush1.msra.mxu0 %v122
  %162 = vmatprep.subr.mxu0 0.0
  %163 = vmatpush1.msra.mxu0 0.0
  %164 = vmatprep.subr.mxu0 0.0
  %165 = vmatpush1.msra.mxu0 0.0
  %166 = vmatprep.subr.mxu0 0.0
  %167 = vmatpush1.msra.mxu0 0.0
  %168 = vmatprep.subr.mxu0 0.0
  %169 = vmatpush1.msra.mxu0 0.0
  %170 = vmatprep.subr.mxu0 0.0
  %171 = vmatpush1.msra.mxu0 0.0
  %172 = vmatprep.subr.mxu0 0.0
  %173 = vmatpush1.msra.mxu0 0.0
  %174 = vmatprep.subr.mxu0 0.0
  %175 = vmatpush1.msra.mxu0 0.0
  %176 = vmatprep.subr.mxu0 0.0
  %177 = vmatpush1.msra.mxu0 0.0
  %178 = vmatprep.subr.mxu0 0.0
  %179 = vmatpush1.msra.mxu0 0.0
  %180 = vmatprep.subr.mxu0 0.0
  %181 = vmatpush1.msra.mxu0 0.0
  %182 = vmatprep.subr.mxu0 0.0
  %183 = vmatpush1.msra.mxu0 0.0
  %184 = vmatprep.subr.mxu0 0.0
  %185 = vmatpush1.msra.mxu0 0.0
  %186 = vmatprep.subr.mxu0 0.0
  %187 = vmatpush1.msra.mxu0 0.0
  %188 = vmatprep.subr.mxu0 0.0
  %189 = vmatpush1.msra.mxu0 0.0
  %190 = vmatprep.subr.mxu0 0.0
  %191 = vmatpush1.msra.mxu0 0.0
  %192 = vmatprep.subr.mxu0 0.0
  %193 = vmatpush1.msra.mxu0 0.0
  %194 = vmatprep.mubr.f32.mxu0 0.0
  %195 = vmatmul.mubr.f32.gmra.mrb[0].mxu0 %v106
  %v196 = vpop.f32.mrb[0].mxu0
  %v197 = vadd.f32 %v128, %v196
  %v198 = vpop.f32.mrb[0].mxu0
  %199 = vdwg.mxu0
  %200 = vst [vmem:[%s5] sm:$0xff] %v197
  // Predicated region
  $region22: #{neuralnet_forward.1} parent=0 // pred_check
    _
  $region23: #{neuralnet_forward.1} parent=0 // pred_check_branch
    %202 = sbr.rel (0) target = $region25
  $region24: #{neuralnet_forward.1} parent=0 // pred_region
    _
  $region25: #{neuralnet_forward.1} parent=0 // pred_fallthru
    _
  // Predicated region
  $region26: #{neuralnet_forward.1} parent=0 // pred_check
    _
  $region27: #{neuralnet_forward.1} parent=0 // pred_check_branch
    %204 = sbr.rel (0) target = $region29
  $region28: #{neuralnet_forward.1} parent=0 // pred_region
    _
  $region29: #{neuralnet_forward.1} parent=0 // pred_fallthru
    _

</llo_original>
